<compile_context>
chip_gen: v7x
topology: tpu7x:2x2x1
jax: 0.10.0
libtpu: 0.0.40
codegen_flags: <defaults>
</compile_context>

<pallas_src>
import math
import jax
import jax.numpy as jnp
from jax import lax
from jax.experimental import pallas as pl
from jax.experimental.pallas import tpu as pltpu

# ---- configuration (b l c layout, consistent with the module) ----
B = 2            # batch
N = 8            # sequence length
DIM = 32         # channels
HEADS = 4
HEAD_DIM = 8     # HEADS * HEAD_DIM == DIM
MLP_DIM = 64
WINDOW = 4
NW = N // WINDOW
SHIFTED = True
DISP = WINDOW // 2
SCALE = HEAD_DIM ** 0.5
INV_SCALE = 1.0 / SCALE
LN_EPS = 1e-5
# exp(x + NEG_INF - max) underflows to exactly 0.0 in f32 == exp(-inf).
NEG_INF = -1e30
HN = HEADS * N   # flattened (head, key) axis of the score tile

# MXU operand dtype.  f32 keeps the parity check tight at this toy size; set
# to jnp.bfloat16 on v6e/v7x at realistic Swin widths (and widen tolerance).
MXU_DTYPE = jnp.float32

# ---- packed, lane-dense parameter slab layout: (P_ROWS, 128) f32 ----
P_COLS = 128
R_WQKVO = 0      # rows 0:32   cols [0:32]=Wq [32:64]=Wk [64:96]=Wv [96:128]=Wo
R_W1 = 32        # rows 32:64  cols [0:64]=W1 [64:96]=head one-hot [96:128]=segment-sum
R_W2 = 64        # rows 64:128 cols [0:32]=W2
R_AUX = 64       # rows 64:72  cols [32:64]=window bias (per-head tiled) [64:72]=shift perm
R_VEC = 128      # rows 128..134: ln1w, ln1b, b_out, ln2w, ln2b, b1, b2
P_ROWS = 136


def _layernorm(x, w, b):
    mu = jnp.mean(x, axis=-1, keepdims=True)
    var = jnp.mean((x - mu) ** 2, axis=-1, keepdims=True)
    return (x - mu) * lax.rsqrt(var + LN_EPS) * w + b


def _gelu_exact(x):
    # nn.GELU() default is the exact erf GELU (kept for parity with PyTorch).
    # TODO(synk): switch to tanh-approx GELU (EUP slot) if bit-parity with
    # nn.GELU() is not required and a bundle dump shows VALU is the bottleneck.
    return 0.5 * x * (1.0 + lax.erf(x * (1.0 / math.sqrt(2.0))))


def swin_block_kernel(x_ref, p_ref, o_ref):
    """One grid step == one batch element: (N, DIM) tokens."""
    f32 = jnp.float32
    x = x_ref[...]                                             # (N, DIM)

    # ---- static views into the packed lane-dense parameter slab ----
    wq = p_ref[R_WQKVO:R_WQKVO + DIM, 0:DIM].astype(MXU_DTYPE)
    wk = p_ref[R_WQKVO:R_WQKVO + DIM, DIM:2 * DIM].astype(MXU_DTYPE)
    wv = p_ref[R_WQKVO:R_WQKVO + DIM, 2 * DIM:3 * DIM].astype(MXU_DTYPE)
    wo = p_ref[R_WQKVO:R_WQKVO + DIM, 3 * DIM:4 * DIM].astype(MXU_DTYPE)
    w1 = p_ref[R_W1:R_W1 + DIM, 0:MLP_DIM].astype(MXU_DTYPE)
    hm_rep = p_ref[R_W1:R_W1 + HN, MLP_DIM:MLP_DIM + DIM]          # (HN, DIM) one-hot
    gseg = p_ref[R_W1:R_W1 + HN, MLP_DIM + DIM:MLP_DIM + DIM + HN] # (HN, HN) 0/1
    w2 = p_ref[R_W2:R_W2 + MLP_DIM, 0:DIM].astype(MXU_DTYPE)
    bias = p_ref[R_AUX:R_AUX + N, DIM:DIM + HN]                    # (N, HN)
    perm = p_ref[R_AUX:R_AUX + N, DIM + HN:DIM + HN + N]           # (N, N)
    vec = p_ref[R_VEC:R_VEC + 8, :]                                # (8, 128)
    ln1w, ln1b = vec[0:1, 0:DIM], vec[1:2, 0:DIM]
    bout = vec[2:3, 0:DIM]
    ln2w, ln2b = vec[3:4, 0:DIM], vec[4:5, 0:DIM]
    b1 = vec[5:6, 0:MLP_DIM]
    b2 = vec[6:7, 0:DIM]

    # ---------------- attention branch: x + att(att_norm(x)) ----------------
    h = _layernorm(x, ln1w, ln1b)
    # CyclicShift(-disp) as a tiny per-batch (N, N) permutation matmul on the
    # otherwise-idle MXU (no cross-lane relayout).
    # TODO(synk): at realistic N, replace with pltpu.roll on the sublane axis
    # / fold the shift into a window-tiled index_map.
    h = jnp.dot(perm, h, preferred_element_type=f32)

    hmx = h.astype(MXU_DTYPE)
    q = jnp.dot(hmx, wq, preferred_element_type=f32)               # (N, DIM)
    k = jnp.dot(hmx, wk, preferred_element_type=f32)
    v = jnp.dot(hmx, wv, preferred_element_type=f32)

    # Per-head keys/values stacked along sublanes and masked with one-hot
    # channel masks: row h*N+j of k4 holds head h's channels of k[j].
    k4 = jnp.concatenate([k] * HEADS, axis=0) * hm_rep             # (HN, DIM)
    v4 = jnp.concatenate([v] * HEADS, axis=0) * hm_rep             # (HN, DIM)

    # ONE (N,DIM)x(DIM,HN) matmul gives all heads' scores (q used directly,
    # no broadcast copies, no 3-D intermediates).
    s = lax.dot_general(q.astype(MXU_DTYPE), k4.astype(MXU_DTYPE),
                        (((1,), (1,)), ((), ())),
                        preferred_element_type=f32) * INV_SCALE    # (N, HN)
    # Window-block-diagonal additive bias (relative-pos bias + shift mask on
    # the last window + NEG_INF across windows), tiled once per head.
    s = s + bias
    # Row-wise max across all heads is a valid per-segment softmax shift
    # (softmax is shift-invariant; each segment keeps >= WINDOW finite scores).
    s = s - jnp.max(s, axis=-1, keepdims=True)
    e = jnp.exp(s)
    # Segmented (per-head) denominator via one MXU matmul against the 0/1
    # same-segment matrix: denom[i, h*N+j] = sum_j' e[i, h*N+j'].
    denom = jnp.dot(e, gseg, preferred_element_type=f32)
    p = e * pl.reciprocal(denom, approx=True)
    # ONE (N,HN)x(HN,DIM) matmul performs attn@V AND the '(h d)' head concat.
    att = jnp.dot(p.astype(MXU_DTYPE), v4.astype(MXU_DTYPE),
                  preferred_element_type=f32)                      # (N, DIM)
    att = jnp.dot(att.astype(MXU_DTYPE), wo, preferred_element_type=f32) + bout
    # (no cyclic back-shift of the output -- matches the reference code)
    x1 = x + att

    # ---------------- MLP branch: x1 + mlp(mlp_norm(x1)) ----------------
    h2 = _layernorm(x1, ln2w, ln2b)
    m = jnp.dot(h2.astype(MXU_DTYPE), w1, preferred_element_type=f32) + b1
    m = _gelu_exact(m)
    m = jnp.dot(m.astype(MXU_DTYPE), w2, preferred_element_type=f32) + b2

    o_ref[...] = x1 + m


def _pack_params(params):
    """Pack all weights + precomputed masks into ONE lane-dense (136,128) slab."""
    (ln1w, ln1b, wqkv, wout, bout, posb, masknw,
     ln2w, ln2b, w1, b1, w2, b2) = params

    # per-batch (N, N) window-block-diagonal additive bias (shifted coords)
    biasN = jnp.full((N, N), NEG_INF, jnp.float32)
    for w in range(NW):
        blk = posb + masknw[w]              # pos bias (+ shift mask on last window)
        biasN = biasN.at[w * WINDOW:(w + 1) * WINDOW,
                         w * WINDOW:(w + 1) * WINDOW].set(blk)
    bias_flat = jnp.tile(biasN, (1, HEADS))                       # (N, HN)

    # per-batch CyclicShift(-disp) as an (N, N) permutation matrix
    src = (jnp.arange(N) + DISP) % N if SHIFTED else jnp.arange(N)
    perm = jnp.zeros((N, N), jnp.float32).at[jnp.arange(N), src].set(1.0)

    # one-hot per-head channel masks, repeated over each head's N key rows
    hm = (jnp.arange(DIM)[None, :] // HEAD_DIM
          == jnp.arange(HEADS)[:, None]).astype(jnp.float32)      # (HEADS, DIM)
    hm_rep = jnp.repeat(hm, N, axis=0)                            # (HN, DIM)

    # same-head-segment indicator matrix for the segmented softmax denominator
    seg = jnp.arange(HN) // N
    gseg = (seg[:, None] == seg[None, :]).astype(jnp.float32)     # (HN, HN)

    P = jnp.zeros((P_ROWS, P_COLS), jnp.float32)
    P = P.at[R_WQKVO:R_WQKVO + DIM, 0:DIM].set(wqkv[:, 0:DIM])
    P = P.at[R_WQKVO:R_WQKVO + DIM, DIM:2 * DIM].set(wqkv[:, DIM:2 * DIM])
    P = P.at[R_WQKVO:R_WQKVO + DIM, 2 * DIM:3 * DIM].set(wqkv[:, 2 * DIM:3 * DIM])
    P = P.at[R_WQKVO:R_WQKVO + DIM, 3 * DIM:4 * DIM].set(wout)
    P = P.at[R_W1:R_W1 + DIM, 0:MLP_DIM].set(w1)
    P = P.at[R_W1:R_W1 + HN, MLP_DIM:MLP_DIM + DIM].set(hm_rep)
    P = P.at[R_W1:R_W1 + HN, MLP_DIM + DIM:MLP_DIM + DIM + HN].set(gseg)
    P = P.at[R_W2:R_W2 + MLP_DIM, 0:DIM].set(w2)
    P = P.at[R_AUX:R_AUX + N, DIM:DIM + HN].set(bias_flat)
    P = P.at[R_AUX:R_AUX + N, DIM + HN:DIM + HN + N].set(perm)
    P = P.at[R_VEC + 0, 0:DIM].set(ln1w.reshape(-1))
    P = P.at[R_VEC + 1, 0:DIM].set(ln1b.reshape(-1))
    P = P.at[R_VEC + 2, 0:DIM].set(bout.reshape(-1))
    P = P.at[R_VEC + 3, 0:DIM].set(ln2w.reshape(-1))
    P = P.at[R_VEC + 4, 0:DIM].set(ln2b.reshape(-1))
    P = P.at[R_VEC + 5, 0:MLP_DIM].set(b1.reshape(-1))
    P = P.at[R_VEC + 6, 0:DIM].set(b2.reshape(-1))
    return P


@jax.jit
def swin_block(x, params):
    """x: (batch, N, DIM) -> (batch, N, DIM).

    Grid = one step per batch element, marked "parallel": shards across the
    two TensorCores on v7x (harmless on v5e/v6e) and scales to larger batches
    without retracing the kernel body.
    """
    b = x.shape[0]
    packed = _pack_params(params)                  # host/XLA side, outside kernel
    x_flat = x.reshape(b * N, DIM)

    out = pl.pallas_call(
        swin_block_kernel,
        out_shape=jax.ShapeDtypeStruct((b * N, DIM), jnp.float32),
        grid_spec=pltpu.PrefetchScalarGridSpec(
            num_scalar_prefetch=0,
            grid=(b,),                             # one step per batch element
            in_specs=[
                pl.BlockSpec((N, DIM), lambda i: (i, 0)),           # per-batch tokens
                pl.BlockSpec((P_ROWS, P_COLS), lambda i: (0, 0)),   # resident params
            ],
            out_specs=pl.BlockSpec((N, DIM), lambda i: (i, 0)),
        ),
        compiler_params=pltpu.CompilerParams(
            dimension_semantics=("parallel",)),
    )(x_flat, packed)
    return out.reshape(b, N, DIM)


# ---------------- pure-JAX reference (mirrors the PyTorch code) ----------------
def ref_forward(x, params):
    (ln1w, ln1b, wqkv, wout, bout, posb, masknw,
     ln2w, ln2b, w1, b1, w2, b2) = params

    def ln(t, w, b):
        mu = t.mean(-1, keepdims=True)
        var = ((t - mu) ** 2).mean(-1, keepdims=True)
        return (t - mu) / jnp.sqrt(var + LN_EPS) * w + b

    h = ln(x, ln1w, ln1b)
    if SHIFTED:
        h = jnp.roll(h, -DISP, axis=1)
    qkv = h @ wqkv
    q, k, v = jnp.split(qkv, 3, axis=-1)

    def towin(t):  # b (nw w) (h d) -> b h nw w d
        return t.reshape(B, NW, WINDOW, HEADS, HEAD_DIM).transpose(0, 3, 1, 2, 4)

    q, k, v = map(towin, (q, k, v))
    dots = jnp.einsum('bhwid,bhwjd->bhwij', q, k) / SCALE
    dots = dots + posb[None, None, None]
    if SHIFTED:
        dots = dots + masknw[None, None]
    attn = jax.nn.softmax(dots, axis=-1)
    out = jnp.einsum('bhwij,bhwjd->bhwid', attn, v)
    out = out.transpose(0, 2, 3, 1, 4).reshape(B, N, DIM)
    out = out @ wout + bout
    x1 = x + out

    h2 = ln(x1, ln2w, ln2b)
    m = h2 @ w1 + b1
    m = 0.5 * m * (1.0 + jax.scipy.special.erf(m / jnp.sqrt(2.0)))
    m = m @ w2 + b2
    return x1 + m


def make_params(key):
    ks = jax.random.split(key, 16)

    def rn(k, shape, scale=0.05):
        return (jax.random.normal(k, shape) * scale).astype(jnp.float32)

    ln1w = (1.0 + rn(ks[0], (1, DIM), 0.1))
    ln1b = rn(ks[1], (1, DIM), 0.1)
    wqkv = rn(ks[2], (DIM, 3 * DIM))
    wout = rn(ks[3], (DIM, DIM))
    bout = rn(ks[4], (1, DIM))

    # relative positional bias: pos_embedding[rel, rel], rel[i,j] = j - i + W - 1
    pos_emb = rn(ks[5], (2 * WINDOW - 1, 2 * WINDOW - 1), 1.0)
    rel = jnp.arange(WINDOW)[None, :] - jnp.arange(WINDOW)[:, None] + WINDOW - 1
    posb = pos_emb[rel, rel].astype(jnp.float32)              # (W, W)

    # shifted-window mask (applied to the last window only)
    mask = jnp.zeros((WINDOW, WINDOW), jnp.float32)
    mask = mask.at[-DISP:, :-DISP].set(NEG_INF)
    mask = mask.at[:-DISP, -DISP:].set(NEG_INF)
    masknw = jnp.zeros((NW, WINDOW, WINDOW), jnp.float32).at[-1].set(mask)

    ln2w = (1.0 + rn(ks[6], (1, DIM), 0.1))
    ln2b = rn(ks[7], (1, DIM), 0.1)
    w1 = rn(ks[8], (DIM, MLP_DIM))
    b1 = rn(ks[9], (1, MLP_DIM))
    w2 = rn(ks[10], (MLP_DIM, DIM))
    b2 = rn(ks[11], (1, DIM))

    return (ln1w, ln1b, wqkv, wout, bout, posb, masknw,
            ln2w, ln2b, w1, b1, w2, b2)


if __name__ == "__main__":
    key = jax.random.PRNGKey(0)
    kx, kp = jax.random.split(key)
    x = jax.random.normal(kx, (B, N, DIM), dtype=jnp.float32)
    params = make_params(kp)

    out = swin_block(x, params)
    out = jax.block_until_ready(out)

    ref = ref_forward(x, params)
    assert out.shape == (B, N, DIM)
    assert bool(jnp.all(jnp.isfinite(out)))
    assert bool(jnp.allclose(out, ref, atol=2e-2, rtol=2e-2)), (
        f"max abs diff {float(jnp.max(jnp.abs(out - ref)))}")

    print("KERNEL_OK")
</pallas_src>

<mosaic_0001>
module attributes {stable_mosaic.version = 11 : i64} {
  func.func @swin_block_kernel(%arg0: i32, %arg1: memref<8x32xf32, #tpu.memory_space<vmem>>, %arg2: memref<136x128xf32, #tpu.memory_space<vmem>>, %arg3: memref<8x32xf32, #tpu.memory_space<vmem>>) attributes {dimension_semantics = [#tpu.dimension_semantics<parallel>], iteration_bounds = array<i64: 2>, scalar_prefetch = 0 : i64, scratch_operands = 0 : i64, tpu.core_type = #tpu.core_type<tc>, window_params = [{transform_indices = @transform_0, window_bounds = array<i64: 8, 32>}, {pipeline_mode = #tpu.pipeline_mode<synchronous>, transform_indices = @transform_1, window_bounds = array<i64: 136, 128>}, {transform_indices = @transform_2, window_bounds = array<i64: 8, 32>}]} {
    %c0 = arith.constant 0 : index
    %c0_0 = arith.constant 0 : index
    %0 = vector.load %arg1[%c0, %c0_0] : memref<8x32xf32, #tpu.memory_space<vmem>>, vector<8x32xf32>
    %c0_1 = arith.constant 0 : index
    %c0_2 = arith.constant 0 : index
    %1 = vector.load %arg2[%c0_1, %c0_2] : memref<136x128xf32, #tpu.memory_space<vmem>>, vector<32x32xf32>
    %c0_3 = arith.constant 0 : index
    %c32 = arith.constant 32 : index
    %2 = vector.load %arg2[%c0_3, %c32] : memref<136x128xf32, #tpu.memory_space<vmem>>, vector<32x32xf32>
    %c0_4 = arith.constant 0 : index
    %c64 = arith.constant 64 : index
    %3 = vector.load %arg2[%c0_4, %c64] : memref<136x128xf32, #tpu.memory_space<vmem>>, vector<32x32xf32>
    %c0_5 = arith.constant 0 : index
    %c96 = arith.constant 96 : index
    %4 = vector.load %arg2[%c0_5, %c96] : memref<136x128xf32, #tpu.memory_space<vmem>>, vector<32x32xf32>
    %c32_6 = arith.constant 32 : index
    %c0_7 = arith.constant 0 : index
    %5 = vector.load %arg2[%c32_6, %c0_7] : memref<136x128xf32, #tpu.memory_space<vmem>>, vector<32x64xf32>
    %c32_8 = arith.constant 32 : index
    %c64_9 = arith.constant 64 : index
    %6 = vector.load %arg2[%c32_8, %c64_9] : memref<136x128xf32, #tpu.memory_space<vmem>>, vector<32x32xf32>
    %c32_10 = arith.constant 32 : index
    %c96_11 = arith.constant 96 : index
    %7 = vector.load %arg2[%c32_10, %c96_11] : memref<136x128xf32, #tpu.memory_space<vmem>>, vector<32x32xf32>
    %c64_12 = arith.constant 64 : index
    %c0_13 = arith.constant 0 : index
    %8 = vector.load %arg2[%c64_12, %c0_13] : memref<136x128xf32, #tpu.memory_space<vmem>>, vector<64x32xf32>
    %c64_14 = arith.constant 64 : index
    %c32_15 = arith.constant 32 : index
    %9 = vector.load %arg2[%c64_14, %c32_15] : memref<136x128xf32, #tpu.memory_space<vmem>>, vector<8x32xf32>
    %c64_16 = arith.constant 64 : index
    %c64_17 = arith.constant 64 : index
    %10 = vector.load %arg2[%c64_16, %c64_17] : memref<136x128xf32, #tpu.memory_space<vmem>>, vector<8x8xf32>
    %c128 = arith.constant 128 : index
    %c0_18 = arith.constant 0 : index
    %11 = vector.load %arg2[%c128, %c0_18] : memref<136x128xf32, #tpu.memory_space<vmem>>, vector<8x128xf32>
    %12 = vector.extract_strided_slice %11 {offsets = [0, 0], sizes = [1, 32], strides = [1, 1]} : vector<8x128xf32> to vector<1x32xf32>
    %13 = vector.extract_strided_slice %11 {offsets = [1, 0], sizes = [1, 32], strides = [1, 1]} : vector<8x128xf32> to vector<1x32xf32>
    %14 = vector.extract_strided_slice %11 {offsets = [2, 0], sizes = [1, 32], strides = [1, 1]} : vector<8x128xf32> to vector<1x32xf32>
    %15 = vector.extract_strided_slice %11 {offsets = [3, 0], sizes = [1, 32], strides = [1, 1]} : vector<8x128xf32> to vector<1x32xf32>
    %16 = vector.extract_strided_slice %11 {offsets = [4, 0], sizes = [1, 32], strides = [1, 1]} : vector<8x128xf32> to vector<1x32xf32>
    %17 = vector.extract_strided_slice %11 {offsets = [5, 0], sizes = [1, 64], strides = [1, 1]} : vector<8x128xf32> to vector<1x64xf32>
    %18 = vector.extract_strided_slice %11 {offsets = [6, 0], sizes = [1, 32], strides = [1, 1]} : vector<8x128xf32> to vector<1x32xf32>
    %cst = arith.constant dense<0.000000e+00> : vector<8xf32>
    %19 = vector.multi_reduction <add>, %0, %cst [1] : vector<8x32xf32> to vector<8xf32>
    %20 = vector.shape_cast %19 : vector<8xf32> to vector<8x1xf32>
    %cst_19 = arith.constant 3.200000e+01 : f32
    %21 = vector.broadcast %cst_19 : f32 to vector<8x1xf32>
    %22 = arith.divf %20, %21 : vector<8x1xf32>
    %23 = vector.broadcast %22 : vector<8x1xf32> to vector<8x32xf32>
    %24 = arith.subf %0, %23 : vector<8x32xf32>
    %25 = arith.mulf %24, %24 : vector<8x32xf32>
    %cst_20 = arith.constant dense<0.000000e+00> : vector<8xf32>
    %26 = vector.multi_reduction <add>, %25, %cst_20 [1] : vector<8x32xf32> to vector<8xf32>
    %27 = vector.shape_cast %26 : vector<8xf32> to vector<8x1xf32>
    %cst_21 = arith.constant 3.200000e+01 : f32
    %28 = vector.broadcast %cst_21 : f32 to vector<8x1xf32>
    %29 = arith.divf %27, %28 : vector<8x1xf32>
    %30 = vector.broadcast %22 : vector<8x1xf32> to vector<8x32xf32>
    %31 = arith.subf %0, %30 : vector<8x32xf32>
    %cst_22 = arith.constant 9.99999974E-6 : f32
    %32 = vector.broadcast %cst_22 : f32 to vector<8x1xf32>
    %33 = arith.addf %29, %32 : vector<8x1xf32>
    %34 = math.rsqrt %33 : vector<8x1xf32>
    %35 = vector.broadcast %34 : vector<8x1xf32> to vector<8x32xf32>
    %36 = arith.mulf %31, %35 : vector<8x32xf32>
    %37 = vector.broadcast %12 : vector<1x32xf32> to vector<8x32xf32>
    %38 = arith.mulf %36, %37 : vector<8x32xf32>
    %39 = vector.broadcast %13 : vector<1x32xf32> to vector<8x32xf32>
    %40 = arith.addf %38, %39 : vector<8x32xf32>
    %cst_23 = arith.constant dense<0.000000e+00> : vector<8x32xf32>
    %41 = tpu.matmul %10, %40, %cst_23 {dimension_numbers = #tpu.dot_dimension_numbers<[1], [0], [0], [1], [0, 0, 1, 1], [], []>} : vector<8x8xf32>, vector<8x32xf32>, vector<8x32xf32> -> vector<8x32xf32>
    %cst_24 = arith.constant dense<0.000000e+00> : vector<8x32xf32>
    %42 = tpu.matmul %41, %1, %cst_24 {dimension_numbers = #tpu.dot_dimension_numbers<[1], [0], [0], [1], [0, 0, 1, 1], [], []>} : vector<8x32xf32>, vector<32x32xf32>, vector<8x32xf32> -> vector<8x32xf32>
    %cst_25 = arith.constant dense<0.000000e+00> : vector<8x32xf32>
    %43 = tpu.matmul %41, %2, %cst_25 {dimension_numbers = #tpu.dot_dimension_numbers<[1], [0], [0], [1], [0, 0, 1, 1], [], []>} : vector<8x32xf32>, vector<32x32xf32>, vector<8x32xf32> -> vector<8x32xf32>
    %cst_26 = arith.constant dense<0.000000e+00> : vector<8x32xf32>
    %44 = tpu.matmul %41, %3, %cst_26 {dimension_numbers = #tpu.dot_dimension_numbers<[1], [0], [0], [1], [0, 0, 1, 1], [], []>} : vector<8x32xf32>, vector<32x32xf32>, vector<8x32xf32> -> vector<8x32xf32>
    %45 = tpu.concatenate %43, %43, %43, %43 in 0 : vector<8x32xf32>, vector<8x32xf32>, vector<8x32xf32>, vector<8x32xf32> -> vector<32x32xf32>
    %46 = arith.mulf %45, %6 : vector<32x32xf32>
    %47 = tpu.concatenate %44, %44, %44, %44 in 0 : vector<8x32xf32>, vector<8x32xf32>, vector<8x32xf32>, vector<8x32xf32> -> vector<32x32xf32>
    %48 = arith.mulf %47, %6 : vector<32x32xf32>
    %cst_27 = arith.constant dense<0.000000e+00> : vector<8x32xf32>
    %49 = tpu.matmul %42, %46, %cst_27 {dimension_numbers = #tpu.dot_dimension_numbers<[1], [1], [0], [0], [0, 0, 1, 0], [], []>} : vector<8x32xf32>, vector<32x32xf32>, vector<8x32xf32> -> vector<8x32xf32>
    %cst_28 = arith.constant 0.353553385 : f32
    %50 = vector.broadcast %cst_28 : f32 to vector<8x32xf32>
    %51 = arith.mulf %49, %50 : vector<8x32xf32>
    %52 = arith.addf %51, %9 : vector<8x32xf32>
    %cst_29 = arith.constant dense<0xFF800000> : vector<8xf32>
    %53 = vector.multi_reduction <maximumf>, %52, %cst_29 [1] : vector<8x32xf32> to vector<8xf32>
    %54 = vector.shape_cast %53 : vector<8xf32> to vector<8x1xf32>
    %55 = vector.broadcast %54 : vector<8x1xf32> to vector<8x32xf32>
    %56 = arith.subf %52, %55 : vector<8x32xf32>
    %57 = math.exp %56 : vector<8x32xf32>
    %cst_30 = arith.constant dense<0.000000e+00> : vector<8x32xf32>
    %58 = tpu.matmul %57, %7, %cst_30 {dimension_numbers = #tpu.dot_dimension_numbers<[1], [0], [0], [1], [0, 0, 1, 1], [], []>} : vector<8x32xf32>, vector<32x32xf32>, vector<8x32xf32> -> vector<8x32xf32>
    %59 = tpu.reciprocal %58 {approx = true} : vector<8x32xf32> -> vector<8x32xf32>
    %60 = arith.mulf %57, %59 : vector<8x32xf32>
    %cst_31 = arith.constant dense<0.000000e+00> : vector<8x32xf32>
    %61 = tpu.matmul %60, %48, %cst_31 {dimension_numbers = #tpu.dot_dimension_numbers<[1], [0], [0], [1], [0, 0, 1, 1], [], []>} : vector<8x32xf32>, vector<32x32xf32>, vector<8x32xf32> -> vector<8x32xf32>
    %cst_32 = arith.constant dense<0.000000e+00> : vector<8x32xf32>
    %62 = tpu.matmul %61, %4, %cst_32 {dimension_numbers = #tpu.dot_dimension_numbers<[1], [0], [0], [1], [0, 0, 1, 1], [], []>} : vector<8x32xf32>, vector<32x32xf32>, vector<8x32xf32> -> vector<8x32xf32>
    %63 = vector.broadcast %14 : vector<1x32xf32> to vector<8x32xf32>
    %64 = arith.addf %62, %63 : vector<8x32xf32>
    %65 = arith.addf %0, %64 : vector<8x32xf32>
    %cst_33 = arith.constant dense<0.000000e+00> : vector<8xf32>
    %66 = vector.multi_reduction <add>, %65, %cst_33 [1] : vector<8x32xf32> to vector<8xf32>
    %67 = vector.shape_cast %66 : vector<8xf32> to vector<8x1xf32>
    %cst_34 = arith.constant 3.200000e+01 : f32
    %68 = vector.broadcast %cst_34 : f32 to vector<8x1xf32>
    %69 = arith.divf %67, %68 : vector<8x1xf32>
    %70 = vector.broadcast %69 : vector<8x1xf32> to vector<8x32xf32>
    %71 = arith.subf %65, %70 : vector<8x32xf32>
    %72 = arith.mulf %71, %71 : vector<8x32xf32>
    %cst_35 = arith.constant dense<0.000000e+00> : vector<8xf32>
    %73 = vector.multi_reduction <add>, %72, %cst_35 [1] : vector<8x32xf32> to vector<8xf32>
    %74 = vector.shape_cast %73 : vector<8xf32> to vector<8x1xf32>
    %cst_36 = arith.constant 3.200000e+01 : f32
    %75 = vector.broadcast %cst_36 : f32 to vector<8x1xf32>
    %76 = arith.divf %74, %75 : vector<8x1xf32>
    %77 = vector.broadcast %69 : vector<8x1xf32> to vector<8x32xf32>
    %78 = arith.subf %65, %77 : vector<8x32xf32>
    %cst_37 = arith.constant 9.99999974E-6 : f32
    %79 = vector.broadcast %cst_37 : f32 to vector<8x1xf32>
    %80 = arith.addf %76, %79 : vector<8x1xf32>
    %81 = math.rsqrt %80 : vector<8x1xf32>
    %82 = vector.broadcast %81 : vector<8x1xf32> to vector<8x32xf32>
    %83 = arith.mulf %78, %82 : vector<8x32xf32>
    %84 = vector.broadcast %15 : vector<1x32xf32> to vector<8x32xf32>
    %85 = arith.mulf %83, %84 : vector<8x32xf32>
    %86 = vector.broadcast %16 : vector<1x32xf32> to vector<8x32xf32>
    %87 = arith.addf %85, %86 : vector<8x32xf32>
    %cst_38 = arith.constant dense<0.000000e+00> : vector<8x64xf32>
    %88 = tpu.matmul %87, %5, %cst_38 {dimension_numbers = #tpu.dot_dimension_numbers<[1], [0], [0], [1], [0, 0, 1, 1], [], []>} : vector<8x32xf32>, vector<32x64xf32>, vector<8x64xf32> -> vector<8x64xf32>
    %89 = vector.broadcast %17 : vector<1x64xf32> to vector<8x64xf32>
    %90 = arith.addf %88, %89 : vector<8x64xf32>
    %cst_39 = arith.constant 5.000000e-01 : f32
    %91 = vector.broadcast %cst_39 : f32 to vector<8x64xf32>
    %92 = arith.mulf %91, %90 : vector<8x64xf32>
    %cst_40 = arith.constant 0.707106769 : f32
    %93 = vector.broadcast %cst_40 : f32 to vector<8x64xf32>
    %94 = arith.mulf %90, %93 : vector<8x64xf32>
    %95 = math.erf %94 : vector<8x64xf32>
    %cst_41 = arith.constant 1.000000e+00 : f32
    %96 = vector.broadcast %cst_41 : f32 to vector<8x64xf32>
    %97 = arith.addf %96, %95 : vector<8x64xf32>
    %98 = arith.mulf %92, %97 : vector<8x64xf32>
    %cst_42 = arith.constant dense<0.000000e+00> : vector<8x32xf32>
    %99 = tpu.matmul %98, %8, %cst_42 {dimension_numbers = #tpu.dot_dimension_numbers<[1], [0], [0], [1], [0, 0, 1, 1], [], []>} : vector<8x64xf32>, vector<64x32xf32>, vector<8x32xf32> -> vector<8x32xf32>
    %100 = vector.broadcast %18 : vector<1x32xf32> to vector<8x32xf32>
    %101 = arith.addf %99, %100 : vector<8x32xf32>
    %102 = arith.addf %65, %101 : vector<8x32xf32>
    %c0_43 = arith.constant 0 : index
    %c0_44 = arith.constant 0 : index
    %103 = vector.load %arg3[%c0_43, %c0_44] : memref<8x32xf32, #tpu.memory_space<vmem>>, vector<8x32xf32>
    tpu.vector_store %arg3[%c0_43, %c0_44], %102 {strides = array<i32>} : memref<8x32xf32, #tpu.memory_space<vmem>>, vector<8x32xf32>,
    return
  }
  func.func @transform_0(%arg0: i32) -> (i32, i32) {
    %c0_i32 = arith.constant 0 : i32
    %c0_i32_0 = arith.constant 0 : i32
    return %arg0, %c0_i32 : i32, i32
  }
  func.func @transform_1(%arg0: i32) -> (i32, i32) {
    %c0_i32 = arith.constant 0 : i32
    %c0_i32_0 = arith.constant 0 : i32
    %c0_i32_1 = arith.constant 0 : i32
    return %c0_i32, %c0_i32_0 : i32, i32
  }
  func.func @transform_2(%arg0: i32) -> (i32, i32) {
    %c0_i32 = arith.constant 0 : i32
    %c0_i32_0 = arith.constant 0 : i32
    return %arg0, %c0_i32 : i32, i32
  }
}

</mosaic_0001>

<llo_original>
// kernel: swin_block.1
$region0: #{swin_block.1}
  #allocation0 [shape = 'u32[]', space=smem, size = 0x4, offset = 0x4, fixed_abs, tag = 'smem constant byte address 0x4 - core index']
  #allocation1 [shape = 'u32[144,128]{1,0:T(1,128)}', space=vmem, size = 0x12000, scoped, tag = 'internal scratch']
  %s0 = inlined_call_operand.vmem [shape: f32[16,32], index: 0, kind: input, shape index: {}]
  %s1 = inlined_call_operand.vmem [shape: f32[136,128], index: 1, kind: input, shape index: {}]
  %s2 = inlined_call_operand.hbm [shape: f32[16,32], index: 2, kind: output, shape index: {}]
  %s3 = sld [smem:[#allocation0]]
  $region41: #{swin_block.1} parent=0
    _
  %s5 = ssub.s32 1, %s3
  %s6 = scalar_select 0, %s5, %s3
  $region1: #{swin_block.1} parent=0
    #allocation2 [shape = 'u8[8192]{0}', space=vmem, size = 0x2000, scoped, tag = 'output window, operand 0']
    #allocation3 [shape = 's32[2]{0}', space=sflag, size = 0x8, scoped, tag = 'scoped memory for swin_block.1']
    %7 = vsyncpa [#allocation3], 0
    %s8 = scalar_lea.sflag [#allocation3], 1
    %9 = vsyncpa %s8, 0
    loop: start=0, step=1, limit=4
    $region2: #{swin_block.1} parent=1 // loop_pre_header
      _
    $region3: #{swin_block.1} parent=1 // loop_header
      %s11 = sphi 0, %s15
      %p12 = scmp.ge.s32.totalorder %s11, 4
      %s21 = sphi 0, %s23
      %s24 = sphi 0, %s21
      %s25 = sphi 0, %s24
      %s41 = sphi 0, %s25
      %s45 = sphi 0, %s45
      %s47 = sphi 0, %s45
      %s48 = sphi 0, %s47
      %s62 = sphi 0, %s48
      %s68 = sphi 0, %s70
      %s71 = sphi 0, %s68
      %s72 = sphi 0, %s71
      %s88 = sphi 0, %s72
    $region4: #{swin_block.1} parent=1 // loop_header_branch
      %14 = sbr.rel (%p12) target = $region8
    $region5: #{swin_block.1} parent=1 // loop_body
      %s16 = ssub.s32 %s11, 1
      %s17 = ssub.s32 %s11, 2
      %s18 = sadd.s32 %s11, 1
      %s19 = ssub.s32 %s11, %s18
      %p20 = scmp.eq.s32.totalorder %s19, 0
      %s22 = sadd.s32 %s21, 1
      %s23 = scalar_select %p20, %s21, %s22
      %p26 = pneg %p20
      %p27 = scmp.eq.s32.totalorder %s11, 1
      %p28 = por %p26, %p27
      %p29 = scmp.ne.s32.totalorder %s21, %s24
      %p30 = scmp.eq.s32.totalorder %s11, 0
      %p31 = por %p29, %p30
      %p32 = scmp.ne.s32.totalorder %s21, %s24
      %p33 = scmp.eq.s32.totalorder %s16, 1
      %p34 = por %p32, %p33
      %p35 = scmp.ne.s32.totalorder %s24, %s25
      %p36 = scmp.eq.s32.totalorder %s16, 0
      %p37 = por %p35, %p36
      %p38 = scmp.ne.s32.totalorder %s24, %s25
      %p39 = scmp.eq.s32.totalorder %s17, 1
      %p40 = por %p38, %p39
      %p42 = scmp.ne.s32.totalorder %s25, %s41
      %p43 = scmp.eq.s32.totalorder %s17, 0
      %p44 = por %p42, %p43
      %s46 = sadd.s32 %s45, 1
      %p49 = scmp.eq.s32.totalorder %s11, 1
      %p50 = scmp.ne.s32.totalorder %s45, %s47
      %p51 = scmp.eq.s32.totalorder %s11, 0
      %p52 = por %p50, %p51
      %p53 = scmp.ne.s32.totalorder %s45, %s47
      %p54 = scmp.eq.s32.totalorder %s16, 1
      %p55 = por %p53, %p54
      %p56 = scmp.ne.s32.totalorder %s47, %s48
      %p57 = scmp.eq.s32.totalorder %s16, 0
      %p58 = por %p56, %p57
      %p59 = scmp.ne.s32.totalorder %s47, %s48
      %p60 = scmp.eq.s32.totalorder %s17, 1
      %p61 = por %p59, %p60
      %p63 = scmp.ne.s32.totalorder %s48, %s62
      %p64 = scmp.eq.s32.totalorder %s17, 0
      %p65 = por %p63, %p64
      %s66 = ssub.s32 %s11, %s18
      %p67 = scmp.eq.s32.totalorder %s66, 0
      %s69 = sadd.s32 %s68, 1
      %s70 = scalar_select %p67, %s68, %s69
      %p73 = pneg %p67
      %p74 = scmp.eq.s32.totalorder %s11, 1
      %p75 = por %p73, %p74
      %p76 = scmp.ne.s32.totalorder %s68, %s71
      %p77 = scmp.eq.s32.totalorder %s11, 0
      %p78 = por %p76, %p77
      %p79 = scmp.ne.s32.totalorder %s68, %s71
      %p80 = scmp.eq.s32.totalorder %s16, 1
      %p81 = por %p79, %p80
      %p82 = scmp.ne.s32.totalorder %s71, %s72
      %p83 = scmp.eq.s32.totalorder %s16, 0
      %p84 = por %p82, %p83
      %p85 = scmp.ne.s32.totalorder %s71, %s72
      %p86 = scmp.eq.s32.totalorder %s17, 1
      %p87 = por %p85, %p86
      %p89 = scmp.ne.s32.totalorder %s72, %s88
      %p90 = scmp.eq.s32.totalorder %s17, 0
      %p91 = por %p89, %p90
      %p92 = scmp.le.s32.totalorder 1, %s11
      %p93 = scmp.lt.s32.totalorder %s11, 3
      %p94 = pnand %p92, %p93
      %p95 = pneg %p94
      // Predicated region
      $region9: #{swin_block.1} parent=5 // pred_check
        _
      $region10: #{swin_block.1} parent=5 // pred_check_branch
        %97 = sbr.rel (%p94) target = $region12
      $region11: #{swin_block.1} parent=5 // pred_region
        %s98 = ssub.s32 %s11, 1
        // Predicated region
        $region13: #{swin_block.1} parent=11 // pred_check
          %p99 = pneg %p58
        $region14: #{swin_block.1} parent=11 // pred_check_branch
          %101 = sbr.rel (%p99) target = $region16
        $region15: #{swin_block.1} parent=11 // pred_region
          _
        $region16: #{swin_block.1} parent=11 // pred_fallthru
          _
      $region12: #{swin_block.1} parent=5 // pred_fallthru
        _
      %p102 = scmp.lt.s32.totalorder %s11, 2
      // Predicated region
      $region17: #{swin_block.1} parent=5 // pred_check
        %p103 = pneg %p102
      $region18: #{swin_block.1} parent=5 // pred_check_branch
        %105 = sbr.rel (%p103) target = $region20
      $region19: #{swin_block.1} parent=5 // pred_region
        // Predicated region
        $region21: #{swin_block.1} parent=19 // pred_check
          %p106 = pneg %p31
        $region22: #{swin_block.1} parent=19 // pred_check_branch
          %108 = sbr.rel (%p106) target = $region24
        $region23: #{swin_block.1} parent=19 // pred_region
          %p109 = scmp.lt.s32.totalorder %s11, 1
          %s110 = scalar_select %p109, %s11, 1
          %s111 = smul.addr %s110, 8
          %s112 = scalar_lea.vmem %s0, %s111
        $region24: #{swin_block.1} parent=19 // pred_fallthru
          _
      $region20: #{swin_block.1} parent=5 // pred_fallthru
        _
      %p113 = scmp.le.s32.totalorder 1, %s11
      %p114 = scmp.lt.s32.totalorder %s11, 3
      %p115 = pnand %p113, %p114
      %p116 = pneg %p115
      // Predicated region
      $region25: #{swin_block.1} parent=5 // pred_check
        _
      $region26: #{swin_block.1} parent=5 // pred_check_branch
        %118 = sbr.rel (%p115) target = $region28
      $region27: #{swin_block.1} parent=5 // pred_region
        %s119 = ssub.s32 %s11, 1
        %p120 = scmp.lt.s32.totalorder %s16, 1
        %s121 = scalar_select %p120, %s16, 1
        %s122 = smul.addr %s121, 8
        %s123 = scalar_lea.vmem %s0, %s122
        %p124 = pneg %p37
        %p125 = pneg %p34
        %p126 = pneg %p58
        %p127 = pneg %p55
        %p128 = pneg %p84
        %p129 = pneg %p81
        %s130 = sand.u32 %s71, 1
        %s131 = scalar_lea.sflag [#allocation3], %s130
        %s132 = sand.u32 %s71, 1
        %s133 = smul.addr %s132, 8
        %s134 = scalar_lea.vmem [#allocation2], %s133
        %p135 = scmp.lt.s32.totalorder %s16, 1
        %s136 = scalar_select %p135, %s16, 1
        %s137 = smul.addr %s136, 8
        %s138 = scalar_lea.vmem %s0, %s137
        %v139 = vld [vmem:[%s138] sm:$0xff]
        %v140 = vld [vmem:[%s1] sm:$0xff]
        %v141 = vld [vmem:[%s1 + $0x8] sm:$0xff]
        %v142 = vld [vmem:[%s1 + $0x10] sm:$0xff]
        %v143 = vld [vmem:[%s1 + $0x18] sm:$0xff]
        %v144 = vld [vmem:[%s1 + $0x20] sm:$0xff]
        %v145 = vld [vmem:[%s1 + $0x28] sm:$0xff]
        %v146 = vld [vmem:[%s1 + $0x30] sm:$0xff]
        %v147 = vld [vmem:[%s1 + $0x38] sm:$0xff]
        %v148 = vld [vmem:[%s1 + $0x40] sm:$0xff]
        %v149 = vld [vmem:[%s1 + $0x48] sm:$0xff]
        %v150 = vld [vmem:[%s1 + $0x50] sm:$0xff]
        %v151 = vld [vmem:[%s1 + $0x58] sm:$0xff]
        %v152 = vld [vmem:[%s1 + $0x60] sm:$0xff]
        %v153 = vld [vmem:[%s1 + $0x68] sm:$0xff]
        %v154 = vld [vmem:[%s1 + $0x70] sm:$0xff]
        %v155 = vld [vmem:[%s1 + $0x78] sm:$0xff]
        %v156 = vld [vmem:[%s1 + $0x80] sm:$0xff]
        %vm157 = vcmask 261120
        %v158 = vsel %vm157, %v139, 0.0
        %159 = vadd.xlane.f32.xlu0 %v158
        %v160 = vpop.xlane.xlu0 %159
        %v161 = vrcp.pop 32.0
        %v162 = vmul.f32 %v160, %v161
        %v163 = vsub.f32 %v139, %v162
        %v164 = vmul.f32 %v163, %v163
        %v165 = vsel %vm157, %v164, 0.0
        %166 = vadd.xlane.f32.xlu0 %v165
        %v167 = vpop.xlane.xlu0 %166
        %v168 = vmul.f32 %v167, %v161
        %v169 = vadd.f32 %v168, 1e-05
        %v170 = vrsqrt.pop %v169
        %v171 = vmul.f32 %v163, %v170
        %v172 = vlaneseq
        %v173 = vshrl.u32 %v172, 7
        %v174 = vsub.s32 0, %v173
        %v175 = vrot.slane %v156, %v174
        %v176 = vmul.f32 %v171, %v175
        %v177 = vlaneseq
        %v178 = vshrl.u32 %v177, 7
        %v179 = vsub.s32 1, %v178
        %v180 = vrot.slane %v156, %v179
        %v181 = vadd.f32 %v176, %v180
        %183 = vrot.lane.b32.xlu0 %v148, 64
        %v184 = vpop.permute.xlu0 %183
        %vm185 = vcmask 64512
        %v186 = vsel %vm185, %v184, 0
        %188 = vmatprep.subr.mxu0 0.0
        %189 = vmatpush1.msra.mxu0 %v181
        %190 = vmatprep.subr.mxu0 0.0
        %191 = vmatpush1.msra.mxu0 0.0
        %192 = vmatprep.subr.mxu0 0.0
        %193 = vmatpush1.msra.mxu0 0.0
        %194 = vmatprep.subr.mxu0 0.0
        %195 = vmatpush1.msra.mxu0 0.0
        %196 = vmatprep.subr.mxu0 0.0
        %197 = vmatpush1.msra.mxu0 0.0
        %198 = vmatprep.subr.mxu0 0.0
        %199 = vmatpush1.msra.mxu0 0.0
        %200 = vmatprep.subr.mxu0 0.0
        %201 = vmatpush1.msra.mxu0 0.0
        %202 = vmatprep.subr.mxu0 0.0
        %203 = vmatpush1.msra.mxu0 0.0
        %204 = vmatprep.subr.mxu0 0.0
        %205 = vmatpush1.msra.mxu0 0.0
        %206 = vmatprep.subr.mxu0 0.0
        %207 = vmatpush1.msra.mxu0 0.0
        %208 = vmatprep.subr.mxu0 0.0
        %209 = vmatpush1.msra.mxu0 0.0
        %210 = vmatprep.subr.mxu0 0.0
        %211 = vmatpush1.msra.mxu0 0.0
        %212 = vmatprep.subr.mxu0 0.0
        %213 = vmatpush1.msra.mxu0 0.0
        %214 = vmatprep.subr.mxu0 0.0
        %215 = vmatpush1.msra.mxu0 0.0
        %216 = vmatprep.subr.mxu0 0.0
        %217 = vmatpush1.msra.mxu0 0.0
        %218 = vmatprep.subr.mxu0 0.0
        %219 = vmatpush1.msra.mxu0 0.0
        %220 = vmatprep.subr.mxu0 0.0
        %221 = vmatpush1.msra.mxu0 0.0
        %222 = vmatprep.subr.mxu0 0.0
        %223 = vmatpush1.msra.mxu0 0.0
        %224 = vmatprep.subr.mxu0 0.0
        %225 = vmatpush1.msra.mxu0 0.0
        %226 = vmatprep.subr.mxu0 0.0
        %227 = vmatpush1.msra.mxu0 0.0
        %228 = vmatprep.subr.mxu0 0.0
        %229 = vmatpush1.msra.mxu0 0.0
        %230 = vmatprep.subr.mxu0 0.0
        %231 = vmatpush1.msra.mxu0 0.0
        %232 = vmatprep.subr.mxu0 0.0
        %233 = vmatpush1.msra.mxu0 0.0
        %234 = vmatprep.subr.mxu0 0.0
        %235 = vmatpush1.msra.mxu0 0.0
        %236 = vmatprep.subr.mxu0 0.0
        %237 = vmatpush1.msra.mxu0 0.0
        %238 = vmatprep.subr.mxu0 0.0
        %239 = vmatpush1.msra.mxu0 0.0
        %240 = vmatprep.subr.mxu0 0.0
        %241 = vmatpush1.msra.mxu0 0.0
        %242 = vmatprep.subr.mxu0 0.0
        %243 = vmatpush1.msra.mxu0 0.0
        %244 = vmatprep.subr.mxu0 0.0
        %245 = vmatpush1.msra.mxu0 0.0
        %246 = vmatprep.subr.mxu0 0.0
        %247 = vmatpush1.msra.mxu0 0.0
        %248 = vmatprep.subr.mxu0 0.0
        %249 = vmatpush1.msra.mxu0 0.0
        %250 = vmatprep.subr.mxu0 0.0
        %251 = vmatpush1.msra.mxu0 0.0
        %252 = vmatprep.mubr.f32.mxu0 0.0
        %253 = vmatmul.mubr.f32.gmra.mrb[0].mxu0 %v186
        %v254 = vpop.f32.mrb[0].mxu0
        %v255 = vadd.f32 0.0, %v254
        %v256 = vpop.f32.mrb[0].mxu0
        %257 = vdwg.mxu0
        %v259 = vsel %vm157, %v255, 0
        %261 = vmatprep.subr.mxu0 0.0
        %262 = vmatpush1.msra.mxu0 %v140
        %263 = vmatprep.subr.mxu0 0.0
        %264 = vmatpush1.msra.mxu0 %v141
        %265 = vmatprep.subr.mxu0 0.0
        %266 = vmatpush1.msra.mxu0 %v142
        %267 = vmatprep.subr.mxu0 0.0
        %268 = vmatpush1.msra.mxu0 %v143
        %269 = vmatprep.subr.mxu0 0.0
        %270 = vmatpush1.msra.mxu0 0.0
        %271 = vmatprep.subr.mxu0 0.0
        %272 = vmatpush1.msra.mxu0 0.0
        %273 = vmatprep.subr.mxu0 0.0
        %274 = vmatpush1.msra.mxu0 0.0
        %275 = vmatprep.subr.mxu0 0.0
        %276 = vmatpush1.msra.mxu0 0.0
        %277 = vmatprep.subr.mxu0 0.0
        %278 = vmatpush1.msra.mxu0 0.0
        %279 = vmatprep.subr.mxu0 0.0
        %280 = vmatpush1.msra.mxu0 0.0
        %281 = vmatprep.subr.mxu0 0.0
        %282 = vmatpush1.msra.mxu0 0.0
        %283 = vmatprep.subr.mxu0 0.0
        %284 = vmatpush1.msra.mxu0 0.0
        %285 = vmatprep.subr.mxu0 0.0
        %286 = vmatpush1.msra.mxu0 0.0
        %287 = vmatprep.subr.mxu0 0.0
        %288 = vmatpush1.msra.mxu0 0.0
        %289 = vmatprep.subr.mxu0 0.0
        %290 = vmatpush1.msra.mxu0 0.0
        %291 = vmatprep.subr.mxu0 0.0
        %292 = vmatpush1.msra.mxu0 0.0
        %293 = vmatprep.subr.mxu0 0.0
        %294 = vmatpush1.msra.mxu0 0.0
        %295 = vmatprep.subr.mxu0 0.0
        %296 = vmatpush1.msra.mxu0 0.0
        %297 = vmatprep.subr.mxu0 0.0
        %298 = vmatpush1.msra.mxu0 0.0
        %299 = vmatprep.subr.mxu0 0.0
        %300 = vmatpush1.msra.mxu0 0.0
        %301 = vmatprep.subr.mxu0 0.0
        %302 = vmatpush1.msra.mxu0 0.0
        %303 = vmatprep.subr.mxu0 0.0
        %304 = vmatpush1.msra.mxu0 0.0
        %305 = vmatprep.subr.mxu0 0.0
        %306 = vmatpush1.msra.mxu0 0.0
        %307 = vmatprep.subr.mxu0 0.0
        %308 = vmatpush1.msra.mxu0 0.0
        %309 = vmatprep.subr.mxu0 0.0
        %310 = vmatpush1.msra.mxu0 0.0
        %311 = vmatprep.subr.mxu0 0.0
        %312 = vmatpush1.msra.mxu0 0.0
        %313 = vmatprep.subr.mxu0 0.0
        %314 = vmatpush1.msra.mxu0 0.0
        %315 = vmatprep.subr.mxu0 0.0
        %316 = vmatpush1.msra.mxu0 0.0
        %317 = vmatprep.subr.mxu0 0.0
        %318 = vmatpush1.msra.mxu0 0.0
        %319 = vmatprep.subr.mxu0 0.0
        %320 = vmatpush1.msra.mxu0 0.0
        %321 = vmatprep.subr.mxu0 0.0
        %322 = vmatpush1.msra.mxu0 0.0
        %323 = vmatprep.subr.mxu0 0.0
        %324 = vmatpush1.msra.mxu0 0.0
        %325 = vmatprep.mubr.f32.mxu0 0.0
        %326 = vmatmul.mubr.f32.gmra.mrb[0].mxu0 %v259
        %v327 = vpop.f32.mrb[0].mxu0
        %v328 = vadd.f32 0.0, %v327
        %v329 = vpop.f32.mrb[0].mxu0
        %330 = vdwg.mxu0
        %335 = vrot.lane.b32.xlu0 %v140, 96
        %v336 = vpop.permute.xlu0 %335
        %337 = vrot.lane.b32.xlu0 %v141, 96
        %v338 = vpop.permute.xlu0 %337
        %339 = vrot.lane.b32.xlu0 %v142, 96
        %v340 = vpop.permute.xlu0 %339
        %341 = vrot.lane.b32.xlu0 %v143, 96
        %v342 = vpop.permute.xlu0 %341
        %347 = vmatprep.subr.mxu0 0.0
        %348 = vmatpush1.msra.mxu0 %v336
        %349 = vmatprep.subr.mxu0 0.0
        %350 = vmatpush1.msra.mxu0 %v338
        %351 = vmatprep.subr.mxu0 0.0
        %352 = vmatpush1.msra.mxu0 %v340
        %353 = vmatprep.subr.mxu0 0.0
        %354 = vmatpush1.msra.mxu0 %v342
        %355 = vmatprep.subr.mxu0 0.0
        %356 = vmatpush1.msra.mxu0 0.0
        %357 = vmatprep.subr.mxu0 0.0
        %358 = vmatpush1.msra.mxu0 0.0
        %359 = vmatprep.subr.mxu0 0.0
        %360 = vmatpush1.msra.mxu0 0.0
        %361 = vmatprep.subr.mxu0 0.0
        %362 = vmatpush1.msra.mxu0 0.0
        %363 = vmatprep.subr.mxu0 0.0
        %364 = vmatpush1.msra.mxu0 0.0
        %365 = vmatprep.subr.mxu0 0.0
        %366 = vmatpush1.msra.mxu0 0.0
        %367 = vmatprep.subr.mxu0 0.0
        %368 = vmatpush1.msra.mxu0 0.0
        %369 = vmatprep.subr.mxu0 0.0
        %370 = vmatpush1.msra.mxu0 0.0
        %371 = vmatprep.subr.mxu0 0.0
        %372 = vmatpush1.msra.mxu0 0.0
        %373 = vmatprep.subr.mxu0 0.0
        %374 = vmatpush1.msra.mxu0 0.0
        %375 = vmatprep.subr.mxu0 0.0
        %376 = vmatpush1.msra.mxu0 0.0
        %377 = vmatprep.subr.mxu0 0.0
        %378 = vmatpush1.msra.mxu0 0.0
        %379 = vmatprep.subr.mxu0 0.0
        %380 = vmatpush1.msra.mxu0 0.0
        %381 = vmatprep.subr.mxu0 0.0
        %382 = vmatpush1.msra.mxu0 0.0
        %383 = vmatprep.subr.mxu0 0.0
        %384 = vmatpush1.msra.mxu0 0.0
        %385 = vmatprep.subr.mxu0 0.0
        %386 = vmatpush1.msra.mxu0 0.0
        %387 = vmatprep.subr.mxu0 0.0
        %388 = vmatpush1.msra.mxu0 0.0
        %389 = vmatprep.subr.mxu0 0.0
        %390 = vmatpush1.msra.mxu0 0.0
        %391 = vmatprep.subr.mxu0 0.0
        %392 = vmatpush1.msra.mxu0 0.0
        %393 = vmatprep.subr.mxu0 0.0
        %394 = vmatpush1.msra.mxu0 0.0
        %395 = vmatprep.subr.mxu0 0.0
        %396 = vmatpush1.msra.mxu0 0.0
        %397 = vmatprep.subr.mxu0 0.0
        %398 = vmatpush1.msra.mxu0 0.0
        %399 = vmatprep.subr.mxu0 0.0
        %400 = vmatpush1.msra.mxu0 0.0
        %401 = vmatprep.subr.mxu0 0.0
        %402 = vmatpush1.msra.mxu0 0.0
        %403 = vmatprep.subr.mxu0 0.0
        %404 = vmatpush1.msra.mxu0 0.0
        %405 = vmatprep.subr.mxu0 0.0
        %406 = vmatpush1.msra.mxu0 0.0
        %407 = vmatprep.subr.mxu0 0.0
        %408 = vmatpush1.msra.mxu0 0.0
        %409 = vmatprep.subr.mxu0 0.0
        %410 = vmatpush1.msra.mxu0 0.0
        %411 = vmatprep.mubr.f32.mxu0 0.0
        %412 = vmatmul.mubr.f32.gmra.mrb[0].mxu0 %v259
        %v413 = vpop.f32.mrb[0].mxu0
        %v414 = vadd.f32 0.0, %v413
        %v415 = vpop.f32.mrb[0].mxu0
        %416 = vdwg.mxu0
        %417 = vrot.lane.b32.xlu0 %v140, 64
        %v418 = vpop.permute.xlu0 %417
        %419 = vrot.lane.b32.xlu0 %v141, 64
        %v420 = vpop.permute.xlu0 %419
        %421 = vrot.lane.b32.xlu0 %v142, 64
        %v422 = vpop.permute.xlu0 %421
        %423 = vrot.lane.b32.xlu0 %v143, 64
        %v424 = vpop.permute.xlu0 %423
        %429 = vmatprep.subr.mxu0 0.0
        %430 = vmatpush1.msra.mxu0 %v418
        %431 = vmatprep.subr.mxu0 0.0
        %432 = vmatpush1.msra.mxu0 %v420
        %433 = vmatprep.subr.mxu0 0.0
        %434 = vmatpush1.msra.mxu0 %v422
        %435 = vmatprep.subr.mxu0 0.0
        %436 = vmatpush1.msra.mxu0 %v424
        %437 = vmatprep.subr.mxu0 0.0
        %438 = vmatpush1.msra.mxu0 0.0
        %439 = vmatprep.subr.mxu0 0.0
        %440 = vmatpush1.msra.mxu0 0.0
        %441 = vmatprep.subr.mxu0 0.0
        %442 = vmatpush1.msra.mxu0 0.0
        %443 = vmatprep.subr.mxu0 0.0
        %444 = vmatpush1.msra.mxu0 0.0
        %445 = vmatprep.subr.mxu0 0.0
        %446 = vmatpush1.msra.mxu0 0.0
        %447 = vmatprep.subr.mxu0 0.0
        %448 = vmatpush1.msra.mxu0 0.0
        %449 = vmatprep.subr.mxu0 0.0
        %450 = vmatpush1.msra.mxu0 0.0
        %451 = vmatprep.subr.mxu0 0.0
        %452 = vmatpush1.msra.mxu0 0.0
        %453 = vmatprep.subr.mxu0 0.0
        %454 = vmatpush1.msra.mxu0 0.0
        %455 = vmatprep.subr.mxu0 0.0
        %456 = vmatpush1.msra.mxu0 0.0
        %457 = vmatprep.subr.mxu0 0.0
        %458 = vmatpush1.msra.mxu0 0.0
        %459 = vmatprep.subr.mxu0 0.0
        %460 = vmatpush1.msra.mxu0 0.0
        %461 = vmatprep.subr.mxu0 0.0
        %462 = vmatpush1.msra.mxu0 0.0
        %463 = vmatprep.subr.mxu0 0.0
        %464 = vmatpush1.msra.mxu0 0.0
        %465 = vmatprep.subr.mxu0 0.0
        %466 = vmatpush1.msra.mxu0 0.0
        %467 = vmatprep.subr.mxu0 0.0
        %468 = vmatpush1.msra.mxu0 0.0
        %469 = vmatprep.subr.mxu0 0.0
        %470 = vmatpush1.msra.mxu0 0.0
        %471 = vmatprep.subr.mxu0 0.0
        %472 = vmatpush1.msra.mxu0 0.0
        %473 = vmatprep.subr.mxu0 0.0
        %474 = vmatpush1.msra.mxu0 0.0
        %475 = vmatprep.subr.mxu0 0.0
        %476 = vmatpush1.msra.mxu0 0.0
        %477 = vmatprep.subr.mxu0 0.0
        %478 = vmatpush1.msra.mxu0 0.0
        %479 = vmatprep.subr.mxu0 0.0
        %480 = vmatpush1.msra.mxu0 0.0
        %481 = vmatprep.subr.mxu0 0.0
        %482 = vmatpush1.msra.mxu0 0.0
        %483 = vmatprep.subr.mxu0 0.0
        %484 = vmatpush1.msra.mxu0 0.0
        %485 = vmatprep.subr.mxu0 0.0
        %486 = vmatpush1.msra.mxu0 0.0
        %487 = vmatprep.subr.mxu0 0.0
        %488 = vmatpush1.msra.mxu0 0.0
        %489 = vmatprep.subr.mxu0 0.0
        %490 = vmatpush1.msra.mxu0 0.0
        %491 = vmatprep.subr.mxu0 0.0
        %492 = vmatpush1.msra.mxu0 0.0
        %493 = vmatprep.mubr.f32.mxu0 0.0
        %494 = vmatmul.mubr.f32.gmra.mrb[0].mxu0 %v259
        %v495 = vpop.f32.mrb[0].mxu0
        %v496 = vadd.f32 0.0, %v495
        %v497 = vpop.f32.mrb[0].mxu0
        %498 = vdwg.mxu0
        %503 = vrot.lane.b32.xlu0 %v144, 64
        %v504 = vpop.permute.xlu0 %503
        %505 = vrot.lane.b32.xlu0 %v145, 64
        %v506 = vpop.permute.xlu0 %505
        %507 = vrot.lane.b32.xlu0 %v146, 64
        %v508 = vpop.permute.xlu0 %507
        %509 = vrot.lane.b32.xlu0 %v147, 64
        %v510 = vpop.permute.xlu0 %509
        %v515 = vmul.f32 %v414, %v504
        %v516 = vmul.f32 %v414, %v506
        %v517 = vmul.f32 %v414, %v508
        %v518 = vmul.f32 %v414, %v510
        %v519 = vmul.f32 %v496, %v504
        %v520 = vmul.f32 %v496, %v506
        %v521 = vmul.f32 %v496, %v508
        %v522 = vmul.f32 %v496, %v510
        %v524 = vsel %vm157, %v328, 0
        %v527 = vsel %vm157, %v515, 0
        %v530 = vsel %vm157, %v516, 0
        %v533 = vsel %vm157, %v517, 0
        %v536 = vsel %vm157, %v518, 0
        %538 = vmatprep.subr.mxu0 0.0
        %539 = vmatpush1.xpose.msra.mxu0 %v527
        %540 = vmatprep.subr.mxu0 0.0
        %541 = vmatpush1.xpose.msra.mxu0 %v530
        %542 = vmatprep.subr.mxu0 0.0
        %543 = vmatpush1.xpose.msra.mxu0 %v533
        %544 = vmatprep.subr.mxu0 0.0
        %545 = vmatpush1.xpose.msra.mxu0 %v536
        %546 = vmatprep.subr.mxu0 0.0
        %547 = vmatpush1.xpose.msra.mxu0 0.0
        %548 = vmatprep.subr.mxu0 0.0
        %549 = vmatpush1.xpose.msra.mxu0 0.0
        %550 = vmatprep.subr.mxu0 0.0
        %551 = vmatpush1.xpose.msra.mxu0 0.0
        %552 = vmatprep.subr.mxu0 0.0
        %553 = vmatpush1.xpose.msra.mxu0 0.0
        %554 = vmatprep.subr.mxu0 0.0
        %555 = vmatpush1.xpose.msra.mxu0 0.0
        %556 = vmatprep.subr.mxu0 0.0
        %557 = vmatpush1.xpose.msra.mxu0 0.0
        %558 = vmatprep.subr.mxu0 0.0
        %559 = vmatpush1.xpose.msra.mxu0 0.0
        %560 = vmatprep.subr.mxu0 0.0
        %561 = vmatpush1.xpose.msra.mxu0 0.0
        %562 = vmatprep.subr.mxu0 0.0
        %563 = vmatpush1.xpose.msra.mxu0 0.0
        %564 = vmatprep.subr.mxu0 0.0
        %565 = vmatpush1.xpose.msra.mxu0 0.0
        %566 = vmatprep.subr.mxu0 0.0
        %567 = vmatpush1.xpose.msra.mxu0 0.0
        %568 = vmatprep.subr.mxu0 0.0
        %569 = vmatpush1.xpose.msra.mxu0 0.0
        %570 = vmatprep.subr.mxu0 0.0
        %571 = vmatpush1.xpose.msra.mxu0 0.0
        %572 = vmatprep.subr.mxu0 0.0
        %573 = vmatpush1.xpose.msra.mxu0 0.0
        %574 = vmatprep.subr.mxu0 0.0
        %575 = vmatpush1.xpose.msra.mxu0 0.0
        %576 = vmatprep.subr.mxu0 0.0
        %577 = vmatpush1.xpose.msra.mxu0 0.0
        %578 = vmatprep.subr.mxu0 0.0
        %579 = vmatpush1.xpose.msra.mxu0 0.0
        %580 = vmatprep.subr.mxu0 0.0
        %581 = vmatpush1.xpose.msra.mxu0 0.0
        %582 = vmatprep.subr.mxu0 0.0
        %583 = vmatpush1.xpose.msra.mxu0 0.0
        %584 = vmatprep.subr.mxu0 0.0
        %585 = vmatpush1.xpose.msra.mxu0 0.0
        %586 = vmatprep.subr.mxu0 0.0
        %587 = vmatpush1.xpose.msra.mxu0 0.0
        %588 = vmatprep.subr.mxu0 0.0
        %589 = vmatpush1.xpose.msra.mxu0 0.0
        %590 = vmatprep.subr.mxu0 0.0
        %591 = vmatpush1.xpose.msra.mxu0 0.0
        %592 = vmatprep.subr.mxu0 0.0
        %593 = vmatpush1.xpose.msra.mxu0 0.0
        %594 = vmatprep.subr.mxu0 0.0
        %595 = vmatpush1.xpose.msra.mxu0 0.0
        %596 = vmatprep.subr.mxu0 0.0
        %597 = vmatpush1.xpose.msra.mxu0 0.0
        %598 = vmatprep.subr.mxu0 0.0
        %599 = vmatpush1.xpose.msra.mxu0 0.0
        %600 = vmatprep.subr.mxu0 0.0
        %601 = vmatpush1.xpose.msra.mxu0 0.0
        %602 = vmatprep.mubr.f32.mxu0 0.0
        %603 = vmatmul.mubr.f32.gmra.mrb[0].mxu0 %v524
        %v604 = vpop.f32.mrb[0].mxu0
        %v605 = vadd.f32 0.0, %v604
        %v606 = vpop.f32.mrb[0].mxu0
        %607 = vdwg.mxu0
        %v608 = vmul.f32 %v605, 0.35355338
        %609 = vrot.lane.b32.xlu0 %v148, 96
        %v610 = vpop.permute.xlu0 %609
        %v612 = vadd.f32 %v608, %v610
        %v613 = vsel %vm157, %v612, -inf
        %614 = vmax.xlane.f32.xlu0 %v613
        %v615 = vpop.xlane.xlu0 %614
        %v616 = vsub.f32 %v612, %v615
        %v617 = vmul.f32 %v616, 1.442695
        %v618 = vpow.pop %v617
        %619 = vrot.lane.b32.xlu0 %v144, 32
        %v620 = vpop.permute.xlu0 %619
        %621 = vrot.lane.b32.xlu0 %v145, 32
        %v622 = vpop.permute.xlu0 %621
        %623 = vrot.lane.b32.xlu0 %v146, 32
        %v624 = vpop.permute.xlu0 %623
        %625 = vrot.lane.b32.xlu0 %v147, 32
        %v626 = vpop.permute.xlu0 %625
        %v632 = vsel %vm157, %v618, 0
        %634 = vmatprep.subr.mxu0 0.0
        %635 = vmatpush1.msra.mxu0 %v620
        %636 = vmatprep.subr.mxu0 0.0
        %637 = vmatpush1.msra.mxu0 %v622
        %638 = vmatprep.subr.mxu0 0.0
        %639 = vmatpush1.msra.mxu0 %v624
        %640 = vmatprep.subr.mxu0 0.0
        %641 = vmatpush1.msra.mxu0 %v626
        %642 = vmatprep.subr.mxu0 0.0
        %643 = vmatpush1.msra.mxu0 0.0
        %644 = vmatprep.subr.mxu0 0.0
        %645 = vmatpush1.msra.mxu0 0.0
        %646 = vmatprep.subr.mxu0 0.0
        %647 = vmatpush1.msra.mxu0 0.0
        %648 = vmatprep.subr.mxu0 0.0
        %649 = vmatpush1.msra.mxu0 0.0
        %650 = vmatprep.subr.mxu0 0.0
        %651 = vmatpush1.msra.mxu0 0.0
        %652 = vmatprep.subr.mxu0 0.0
        %653 = vmatpush1.msra.mxu0 0.0
        %654 = vmatprep.subr.mxu0 0.0
        %655 = vmatpush1.msra.mxu0 0.0
        %656 = vmatprep.subr.mxu0 0.0
        %657 = vmatpush1.msra.mxu0 0.0
        %658 = vmatprep.subr.mxu0 0.0
        %659 = vmatpush1.msra.mxu0 0.0
        %660 = vmatprep.subr.mxu0 0.0
        %661 = vmatpush1.msra.mxu0 0.0
        %662 = vmatprep.subr.mxu0 0.0
        %663 = vmatpush1.msra.mxu0 0.0
        %664 = vmatprep.subr.mxu0 0.0
        %665 = vmatpush1.msra.mxu0 0.0
        %666 = vmatprep.subr.mxu0 0.0
        %667 = vmatpush1.msra.mxu0 0.0
        %668 = vmatprep.subr.mxu0 0.0
        %669 = vmatpush1.msra.mxu0 0.0
        %670 = vmatprep.subr.mxu0 0.0
        %671 = vmatpush1.msra.mxu0 0.0
        %672 = vmatprep.subr.mxu0 0.0
        %673 = vmatpush1.msra.mxu0 0.0
        %674 = vmatprep.subr.mxu0 0.0
        %675 = vmatpush1.msra.mxu0 0.0
        %676 = vmatprep.subr.mxu0 0.0
        %677 = vmatpush1.msra.mxu0 0.0
        %678 = vmatprep.subr.mxu0 0.0
        %679 = vmatpush1.msra.mxu0 0.0
        %680 = vmatprep.subr.mxu0 0.0
        %681 = vmatpush1.msra.mxu0 0.0
        %682 = vmatprep.subr.mxu0 0.0
        %683 = vmatpush1.msra.mxu0 0.0
        %684 = vmatprep.subr.mxu0 0.0
        %685 = vmatpush1.msra.mxu0 0.0
        %686 = vmatprep.subr.mxu0 0.0
        %687 = vmatpush1.msra.mxu0 0.0
        %688 = vmatprep.subr.mxu0 0.0
        %689 = vmatpush1.msra.mxu0 0.0
        %690 = vmatprep.subr.mxu0 0.0
        %691 = vmatpush1.msra.mxu0 0.0
        %692 = vmatprep.subr.mxu0 0.0
        %693 = vmatpush1.msra.mxu0 0.0
        %694 = vmatprep.subr.mxu0 0.0
        %695 = vmatpush1.msra.mxu0 0.0
        %696 = vmatprep.subr.mxu0 0.0
        %697 = vmatpush1.msra.mxu0 0.0
        %698 = vmatprep.mubr.f32.mxu0 0.0
        %699 = vmatmul.mubr.f32.gmra.mrb[0].mxu0 %v632
        %v700 = vpop.f32.mrb[0].mxu0
        %v701 = vadd.f32 0.0, %v700
        %v702 = vpop.f32.mrb[0].mxu0
        %703 = vdwg.mxu0
        %v704 = vrcp.pop %v701
        %v705 = vmul.f32 %v618, %v704
        %v707 = vsel %vm157, %v705, 0
        %709 = vmatprep.subr.mxu0 0.0
        %710 = vmatpush1.msra.mxu0 %v519
        %711 = vmatprep.subr.mxu0 0.0
        %712 = vmatpush1.msra.mxu0 %v520
        %713 = vmatprep.subr.mxu0 0.0
        %714 = vmatpush1.msra.mxu0 %v521
        %715 = vmatprep.subr.mxu0 0.0
        %716 = vmatpush1.msra.mxu0 %v522
        %717 = vmatprep.subr.mxu0 0.0
        %718 = vmatpush1.msra.mxu0 0.0
        %719 = vmatprep.subr.mxu0 0.0
        %720 = vmatpush1.msra.mxu0 0.0
        %721 = vmatprep.subr.mxu0 0.0
        %722 = vmatpush1.msra.mxu0 0.0
        %723 = vmatprep.subr.mxu0 0.0
        %724 = vmatpush1.msra.mxu0 0.0
        %725 = vmatprep.subr.mxu0 0.0
        %726 = vmatpush1.msra.mxu0 0.0
        %727 = vmatprep.subr.mxu0 0.0
        %728 = vmatpush1.msra.mxu0 0.0
        %729 = vmatprep.subr.mxu0 0.0
        %730 = vmatpush1.msra.mxu0 0.0
        %731 = vmatprep.subr.mxu0 0.0
        %732 = vmatpush1.msra.mxu0 0.0
        %733 = vmatprep.subr.mxu0 0.0
        %734 = vmatpush1.msra.mxu0 0.0
        %735 = vmatprep.subr.mxu0 0.0
        %736 = vmatpush1.msra.mxu0 0.0
        %737 = vmatprep.subr.mxu0 0.0
        %738 = vmatpush1.msra.mxu0 0.0
        %739 = vmatprep.subr.mxu0 0.0
        %740 = vmatpush1.msra.mxu0 0.0
        %741 = vmatprep.subr.mxu0 0.0
        %742 = vmatpush1.msra.mxu0 0.0
        %743 = vmatprep.subr.mxu0 0.0
        %744 = vmatpush1.msra.mxu0 0.0
        %745 = vmatprep.subr.mxu0 0.0
        %746 = vmatpush1.msra.mxu0 0.0
        %747 = vmatprep.subr.mxu0 0.0
        %748 = vmatpush1.msra.mxu0 0.0
        %749 = vmatprep.subr.mxu0 0.0
        %750 = vmatpush1.msra.mxu0 0.0
        %751 = vmatprep.subr.mxu0 0.0
        %752 = vmatpush1.msra.mxu0 0.0
        %753 = vmatprep.subr.mxu0 0.0
        %754 = vmatpush1.msra.mxu0 0.0
        %755 = vmatprep.subr.mxu0 0.0
        %756 = vmatpush1.msra.mxu0 0.0
        %757 = vmatprep.subr.mxu0 0.0
        %758 = vmatpush1.msra.mxu0 0.0
        %759 = vmatprep.subr.mxu0 0.0
        %760 = vmatpush1.msra.mxu0 0.0
        %761 = vmatprep.subr.mxu0 0.0
        %762 = vmatpush1.msra.mxu0 0.0
        %763 = vmatprep.subr.mxu0 0.0
        %764 = vmatpush1.msra.mxu0 0.0
        %765 = vmatprep.subr.mxu0 0.0
        %766 = vmatpush1.msra.mxu0 0.0
        %767 = vmatprep.subr.mxu0 0.0
        %768 = vmatpush1.msra.mxu0 0.0
        %769 = vmatprep.subr.mxu0 0.0
        %770 = vmatpush1.msra.mxu0 0.0
        %771 = vmatprep.subr.mxu0 0.0
        %772 = vmatpush1.msra.mxu0 0.0
        %773 = vmatprep.mubr.f32.mxu0 0.0
        %774 = vmatmul.mubr.f32.gmra.mrb[0].mxu0 %v707
        %v775 = vpop.f32.mrb[0].mxu0
        %v776 = vadd.f32 0.0, %v775
        %v777 = vpop.f32.mrb[0].mxu0
        %778 = vdwg.mxu0
        %v779 = vlaneseq
        %v780 = vshrl.u32 %v779, 7
        %v781 = vsub.s32 2, %v780
        %v782 = vrot.slane %v156, %v781
        %783 = vrot.lane.b32.xlu0 %v140, 32
        %v784 = vpop.permute.xlu0 %783
        %785 = vrot.lane.b32.xlu0 %v141, 32
        %v786 = vpop.permute.xlu0 %785
        %787 = vrot.lane.b32.xlu0 %v142, 32
        %v788 = vpop.permute.xlu0 %787
        %789 = vrot.lane.b32.xlu0 %v143, 32
        %v790 = vpop.permute.xlu0 %789
        %v796 = vsel %vm157, %v776, 0
        %798 = vmatprep.subr.mxu0 0.0
        %799 = vmatpush1.msra.mxu0 %v784
        %800 = vmatprep.subr.mxu0 0.0
        %801 = vmatpush1.msra.mxu0 %v786
        %802 = vmatprep.subr.mxu0 0.0
        %803 = vmatpush1.msra.mxu0 %v788
        %804 = vmatprep.subr.mxu0 0.0
        %805 = vmatpush1.msra.mxu0 %v790
        %806 = vmatprep.subr.mxu0 0.0
        %807 = vmatpush1.msra.mxu0 0.0
        %808 = vmatprep.subr.mxu0 0.0
        %809 = vmatpush1.msra.mxu0 0.0
        %810 = vmatprep.subr.mxu0 0.0
        %811 = vmatpush1.msra.mxu0 0.0
        %812 = vmatprep.subr.mxu0 0.0
        %813 = vmatpush1.msra.mxu0 0.0
        %814 = vmatprep.subr.mxu0 0.0
        %815 = vmatpush1.msra.mxu0 0.0
        %816 = vmatprep.subr.mxu0 0.0
        %817 = vmatpush1.msra.mxu0 0.0
        %818 = vmatprep.subr.mxu0 0.0
        %819 = vmatpush1.msra.mxu0 0.0
        %820 = vmatprep.subr.mxu0 0.0
        %821 = vmatpush1.msra.mxu0 0.0
        %822 = vmatprep.subr.mxu0 0.0
        %823 = vmatpush1.msra.mxu0 0.0
        %824 = vmatprep.subr.mxu0 0.0
        %825 = vmatpush1.msra.mxu0 0.0
        %826 = vmatprep.subr.mxu0 0.0
        %827 = vmatpush1.msra.mxu0 0.0
        %828 = vmatprep.subr.mxu0 0.0
        %829 = vmatpush1.msra.mxu0 0.0
        %830 = vmatprep.subr.mxu0 0.0
        %831 = vmatpush1.msra.mxu0 0.0
        %832 = vmatprep.subr.mxu0 0.0
        %833 = vmatpush1.msra.mxu0 0.0
        %834 = vmatprep.subr.mxu0 0.0
        %835 = vmatpush1.msra.mxu0 0.0
        %836 = vmatprep.subr.mxu0 0.0
        %837 = vmatpush1.msra.mxu0 0.0
        %838 = vmatprep.subr.mxu0 0.0
        %839 = vmatpush1.msra.mxu0 0.0
        %840 = vmatprep.subr.mxu0 0.0
        %841 = vmatpush1.msra.mxu0 0.0
        %842 = vmatprep.subr.mxu0 0.0
        %843 = vmatpush1.msra.mxu0 0.0
        %844 = vmatprep.subr.mxu0 0.0
        %845 = vmatpush1.msra.mxu0 0.0
        %846 = vmatprep.subr.mxu0 0.0
        %847 = vmatpush1.msra.mxu0 0.0
        %848 = vmatprep.subr.mxu0 0.0
        %849 = vmatpush1.msra.mxu0 0.0
        %850 = vmatprep.subr.mxu0 0.0
        %851 = vmatpush1.msra.mxu0 0.0
        %852 = vmatprep.subr.mxu0 0.0
        %853 = vmatpush1.msra.mxu0 0.0
        %854 = vmatprep.subr.mxu0 0.0
        %855 = vmatpush1.msra.mxu0 0.0
        %856 = vmatprep.subr.mxu0 0.0
        %857 = vmatpush1.msra.mxu0 0.0
        %858 = vmatprep.subr.mxu0 0.0
        %859 = vmatpush1.msra.mxu0 0.0
        %860 = vmatprep.subr.mxu0 0.0
        %861 = vmatpush1.msra.mxu0 0.0
        %862 = vmatprep.mubr.f32.mxu0 0.0
        %863 = vmatmul.mubr.f32.gmra.mrb[0].mxu0 %v796
        %v864 = vpop.f32.mrb[0].mxu0
        %v865 = vadd.f32 %v782, %v864
        %v866 = vpop.f32.mrb[0].mxu0
        %867 = vdwg.mxu0
        %v868 = vadd.f32 %v139, %v865
        %v869 = vsel %vm157, %v868, 0.0
        %870 = vadd.xlane.f32.xlu0 %v869
        %v871 = vpop.xlane.xlu0 %870
        %v872 = vmul.f32 %v871, %v161
        %v873 = vsub.f32 %v868, %v872
        %v874 = vmul.f32 %v873, %v873
        %v875 = vsel %vm157, %v874, 0.0
        %876 = vadd.xlane.f32.xlu0 %v875
        %v877 = vpop.xlane.xlu0 %876
        %v878 = vmul.f32 %v877, %v161
        %v879 = vadd.f32 %v878, 1e-05
        %v880 = vrsqrt.pop %v879
        %v881 = vmul.f32 %v873, %v880
        %v882 = vlaneseq
        %v883 = vshrl.u32 %v882, 7
        %v884 = vsub.s32 3, %v883
        %v885 = vrot.slane %v156, %v884
        %v886 = vmul.f32 %v881, %v885
        %v887 = vlaneseq
        %v888 = vshrl.u32 %v887, 7
        %v889 = vsub.s32 4, %v888
        %v890 = vrot.slane %v156, %v889
        %v891 = vadd.f32 %v886, %v890
        %v892 = vlaneseq
        %v893 = vshrl.u32 %v892, 7
        %v894 = vsub.s32 5, %v893
        %v895 = vrot.slane %v156, %v894
        %v897 = vsel %vm157, %v891, 0
        %899 = vmatprep.subr.mxu0 0.0
        %900 = vmatpush1.msra.mxu0 %v144
        %901 = vmatprep.subr.mxu0 0.0
        %902 = vmatpush1.msra.mxu0 %v145
        %903 = vmatprep.subr.mxu0 0.0
        %904 = vmatpush1.msra.mxu0 %v146
        %905 = vmatprep.subr.mxu0 0.0
        %906 = vmatpush1.msra.mxu0 %v147
        %907 = vmatprep.subr.mxu0 0.0
        %908 = vmatpush1.msra.mxu0 0.0
        %909 = vmatprep.subr.mxu0 0.0
        %910 = vmatpush1.msra.mxu0 0.0
        %911 = vmatprep.subr.mxu0 0.0
        %912 = vmatpush1.msra.mxu0 0.0
        %913 = vmatprep.subr.mxu0 0.0
        %914 = vmatpush1.msra.mxu0 0.0
        %915 = vmatprep.subr.mxu0 0.0
        %916 = vmatpush1.msra.mxu0 0.0
        %917 = vmatprep.subr.mxu0 0.0
        %918 = vmatpush1.msra.mxu0 0.0
        %919 = vmatprep.subr.mxu0 0.0
        %920 = vmatpush1.msra.mxu0 0.0
        %921 = vmatprep.subr.mxu0 0.0
        %922 = vmatpush1.msra.mxu0 0.0
        %923 = vmatprep.subr.mxu0 0.0
        %924 = vmatpush1.msra.mxu0 0.0
        %925 = vmatprep.subr.mxu0 0.0
        %926 = vmatpush1.msra.mxu0 0.0
        %927 = vmatprep.subr.mxu0 0.0
        %928 = vmatpush1.msra.mxu0 0.0
        %929 = vmatprep.subr.mxu0 0.0
        %930 = vmatpush1.msra.mxu0 0.0
        %931 = vmatprep.subr.mxu0 0.0
        %932 = vmatpush1.msra.mxu0 0.0
        %933 = vmatprep.subr.mxu0 0.0
        %934 = vmatpush1.msra.mxu0 0.0
        %935 = vmatprep.subr.mxu0 0.0
        %936 = vmatpush1.msra.mxu0 0.0
        %937 = vmatprep.subr.mxu0 0.0
        %938 = vmatpush1.msra.mxu0 0.0
        %939 = vmatprep.subr.mxu0 0.0
        %940 = vmatpush1.msra.mxu0 0.0
        %941 = vmatprep.subr.mxu0 0.0
        %942 = vmatpush1.msra.mxu0 0.0
        %943 = vmatprep.subr.mxu0 0.0
        %944 = vmatpush1.msra.mxu0 0.0
        %945 = vmatprep.subr.mxu0 0.0
        %946 = vmatpush1.msra.mxu0 0.0
        %947 = vmatprep.subr.mxu0 0.0
        %948 = vmatpush1.msra.mxu0 0.0
        %949 = vmatprep.subr.mxu0 0.0
        %950 = vmatpush1.msra.mxu0 0.0
        %951 = vmatprep.subr.mxu0 0.0
        %952 = vmatpush1.msra.mxu0 0.0
        %953 = vmatprep.subr.mxu0 0.0
        %954 = vmatpush1.msra.mxu0 0.0
        %955 = vmatprep.subr.mxu0 0.0
        %956 = vmatpush1.msra.mxu0 0.0
        %957 = vmatprep.subr.mxu0 0.0
        %958 = vmatpush1.msra.mxu0 0.0
        %959 = vmatprep.subr.mxu0 0.0
        %960 = vmatpush1.msra.mxu0 0.0
        %961 = vmatprep.subr.mxu0 0.0
        %962 = vmatpush1.msra.mxu0 0.0
        %963 = vmatprep.mubr.f32.mxu0 0.0
        %964 = vmatmul.mubr.f32.gmra.mrb[0].mxu0 %v897
        %v965 = vpop.f32.mrb[0].mxu0
        %v966 = vadd.f32 %v895, %v965
        %v967 = vpop.f32.mrb[0].mxu0
        %968 = vdwg.mxu0
        %v969 = vmul.f32 %v966, 0.5
        %v970 = vmul.f32 %v966, 0.70710677
        %v971 = verf.f32.pop %v970
        %v972 = vadd.f32 %v971, 1.0
        %v973 = vmul.f32 %v969, %v972
        %v974 = vlaneseq
        %v975 = vshrl.u32 %v974, 7
        %v976 = vsub.s32 6, %v975
        %v977 = vrot.slane %v156, %v976
        %vm978 = vcmask 523264
        %v980 = vsel %vm978, %v973, 0
        %982 = vmatprep.subr.mxu0 0.0
        %983 = vmatpush1.msra.mxu0 %v148
        %984 = vmatprep.subr.mxu0 0.0
        %985 = vmatpush1.msra.mxu0 %v149
        %986 = vmatprep.subr.mxu0 0.0
        %987 = vmatpush1.msra.mxu0 %v150
        %988 = vmatprep.subr.mxu0 0.0
        %989 = vmatpush1.msra.mxu0 %v151
        %990 = vmatprep.subr.mxu0 0.0
        %991 = vmatpush1.msra.mxu0 %v152
        %992 = vmatprep.subr.mxu0 0.0
        %993 = vmatpush1.msra.mxu0 %v153
        %994 = vmatprep.subr.mxu0 0.0
        %995 = vmatpush1.msra.mxu0 %v154
        %996 = vmatprep.subr.mxu0 0.0
        %997 = vmatpush1.msra.mxu0 %v155
        %998 = vmatprep.subr.mxu0 0.0
        %999 = vmatpush1.msra.mxu0 0.0
        %1000 = vmatprep.subr.mxu0 0.0
        %1001 = vmatpush1.msra.mxu0 0.0
        %1002 = vmatprep.subr.mxu0 0.0
        %1003 = vmatpush1.msra.mxu0 0.0
        %1004 = vmatprep.subr.mxu0 0.0
        %1005 = vmatpush1.msra.mxu0 0.0
        %1006 = vmatprep.subr.mxu0 0.0
        %1007 = vmatpush1.msra.mxu0 0.0
        %1008 = vmatprep.subr.mxu0 0.0
        %1009 = vmatpush1.msra.mxu0 0.0
        %1010 = vmatprep.subr.mxu0 0.0
        %1011 = vmatpush1.msra.mxu0 0.0
        %1012 = vmatprep.subr.mxu0 0.0
        %1013 = vmatpush1.msra.mxu0 0.0
        %1014 = vmatprep.subr.mxu0 0.0
        %1015 = vmatpush1.msra.mxu0 0.0
        %1016 = vmatprep.subr.mxu0 0.0
        %1017 = vmatpush1.msra.mxu0 0.0
        %1018 = vmatprep.subr.mxu0 0.0
        %1019 = vmatpush1.msra.mxu0 0.0
        %1020 = vmatprep.subr.mxu0 0.0
        %1021 = vmatpush1.msra.mxu0 0.0
        %1022 = vmatprep.subr.mxu0 0.0
        %1023 = vmatpush1.msra.mxu0 0.0
        %1024 = vmatprep.subr.mxu0 0.0
        %1025 = vmatpush1.msra.mxu0 0.0
        %1026 = vmatprep.subr.mxu0 0.0
        %1027 = vmatpush1.msra.mxu0 0.0
        %1028 = vmatprep.subr.mxu0 0.0
        %1029 = vmatpush1.msra.mxu0 0.0
        %1030 = vmatprep.subr.mxu0 0.0
        %1031 = vmatpush1.msra.mxu0 0.0
        %1032 = vmatprep.subr.mxu0 0.0
        %1033 = vmatpush1.msra.mxu0 0.0
        %1034 = vmatprep.subr.mxu0 0.0
        %1035 = vmatpush1.msra.mxu0 0.0
        %1036 = vmatprep.subr.mxu0 0.0
        %1037 = vmatpush1.msra.mxu0 0.0
        %1038 = vmatprep.subr.mxu0 0.0
        %1039 = vmatpush1.msra.mxu0 0.0
        %1040 = vmatprep.subr.mxu0 0.0
        %1041 = vmatpush1.msra.mxu0 0.0
        %1042 = vmatprep.subr.mxu0 0.0
        %1043 = vmatpush1.msra.mxu0 0.0
        %1044 = vmatprep.subr.mxu0 0.0
        %1045 = vmatpush1.msra.mxu0 0.0
        %1046 = vmatprep.mubr.f32.mxu0 0.0
        %1047 = vmatmul.mubr.f32.gmra.mrb[0].mxu0 %v980
        %v1048 = vpop.f32.mrb[0].mxu0
        %v1049 = vadd.f32 %v977, %v1048
        %v1050 = vpop.f32.mrb[0].mxu0
        %1051 = vdwg.mxu0
        %v1052 = vadd.f32 %v868, %v1049
        %1053 = vst.msk [vmem:[%s134] sm:$0xff] %vm157, %v1052
        %s1054 = sand.u32 %s71, 1
        %s1055 = scalar_lea.sflag [#allocation3], %s1054
        %s1056 = sand.u32 %s71, 1
        %s1057 = smul.addr %s1056, 8
        %s1058 = scalar_lea.vmem [#allocation2], %s1057
        // Predicated region
        $region29: #{swin_block.1} parent=27 // pred_check
          %p1059 = pneg %p81
        $region30: #{swin_block.1} parent=27 // pred_check_branch
          %1061 = sbr.rel (%p1059) target = $region32
        $region31: #{swin_block.1} parent=27 // pred_region
          %s1063 = ssub.s32 128, 128
          %1064 = vsyncadd %s1055, %s1063
          %s1065 = smul.addr %s16, 128
          %s1066 = scalar_lea.hbm %s2, %s1065
          %s1068 = sshll.u32 %s1058, 4
          %s1069 = int_to_ptr.vmem [resolvable:$true] %s1068
          %1071 = dma.vmem_to_hbm [thread:$0]  %s1069, 128, %s1066, %s1055
        $region32: #{swin_block.1} parent=27 // pred_fallthru
          _
      $region28: #{swin_block.1} parent=5 // pred_fallthru
        _
      %p1072 = scmp.le.s32.totalorder 2, %s11
      // Predicated region
      $region33: #{swin_block.1} parent=5 // pred_check
        %p1073 = pneg %p1072
      $region34: #{swin_block.1} parent=5 // pred_check_branch
        %1075 = sbr.rel (%p1073) target = $region36
      $region35: #{swin_block.1} parent=5 // pred_region
        %s1076 = ssub.s32 %s11, 2
        // Predicated region
        $region37: #{swin_block.1} parent=35 // pred_check
          %p1077 = pneg %p87
        $region38: #{swin_block.1} parent=35 // pred_check_branch
          %1079 = sbr.rel (%p1077) target = $region40
        $region39: #{swin_block.1} parent=35 // pred_region
          %s1080 = sand.u32 %s72, 1
          %s1081 = scalar_lea.sflag [#allocation3], %s1080
          %s1082 = sand.u32 %s72, 1
          %s1083 = smul.addr %s1082, 8
          %s1084 = scalar_lea.vmem [#allocation2], %s1083
          %1085 = dma.done %s1081, 128
        $region40: #{swin_block.1} parent=35 // pred_fallthru
          _
      $region36: #{swin_block.1} parent=5 // pred_fallthru
        _
    $region6: #{swin_block.1} parent=1 // loop_footer
      %s15 = sadd.s32 1, %s11
    $region7: #{swin_block.1} parent=1 // loop_footer_branch
      %10 = sbr.rel target = $region3
    $region8: #{swin_block.1} parent=1 // loop_exit
      _
    %1086 = vsyncpa [#allocation3], 1
    %s1087 = scalar_lea.sflag [#allocation3], 1
    %1088 = vsyncpa %s1087, 1

</llo_original>
